<compile_context>
chip_gen: v5e
topology: v5e:2x2
jax: 0.10.0
libtpu: 0.0.40
codegen_flags: <defaults>
</compile_context>

<pallas_src>
import jax
import jax.numpy as jnp
from jax.experimental import pallas as pl
from jax.experimental.pallas import tpu as pltpu


def _additive_attention_kernel(enc_ref, hid_ref, wq_ref, wk_ref, v_ref, out_ref):
    """enc_ref: (B, T, H), hid_ref: (1, B, H), wq/wk: (H, H) stored (in, out),
    v_ref: (1, H) (PyTorch nn.Linear(H, 1).weight), out_ref: (B, T)."""
    B, T, H = enc_ref.shape

    # ---- query projection: one (B, H) x (H, H) matmul -----------------------
    q = jnp.dot(hid_ref[0], wq_ref[...], preferred_element_type=jnp.float32)     # (B, H)

    # ---- key projection: one batched lane-dense (B*T, H) x (H, H) matmul ----
    k = jnp.dot(enc_ref[...].reshape(B * T, H), wk_ref[...],
                preferred_element_type=jnp.float32).reshape(B, T, H)              # (B, T, H)

    # ---- additive combine + tanh (EUP) --------------------------------------
    combined = jnp.tanh(k + q[:, None, :])                                        # (B, T, H)

    # ---- score = combined . v  (VPU mul + XLU lane reduce; avoids a
    #      lane-sparse single-column MXU output) ------------------------------
    scores = jnp.sum(combined * v_ref[...], axis=-1)                              # (B, T)

    # ---- softmax over the sequence axis (dim=1), numerically stable ---------
    m = jnp.max(scores, axis=1, keepdims=True)
    e = jnp.exp(scores - m)
    out_ref[...] = e / jnp.sum(e, axis=1, keepdims=True)


def additive_attention_pallas(encoder_outputs, hidden, params):
    """encoder_outputs: (B, T, H); hidden: (1, B, H). Returns attention weights (B, T)."""
    wq, wk, v = params
    B, T, H = encoder_outputs.shape

    vmem = pl.BlockSpec(memory_space=pltpu.MemorySpace.VMEM)
    return pl.pallas_call(
        _additive_attention_kernel,
        out_shape=jax.ShapeDtypeStruct((B, T), jnp.float32),
        in_specs=[vmem, vmem, vmem, vmem, vmem],
        out_specs=pl.BlockSpec(memory_space=pltpu.MemorySpace.VMEM),
    )(encoder_outputs, hidden, wq, wk, v)


def additive_attention_ref(encoder_outputs, hidden, params):
    """Pure-JAX reference matching the PyTorch forward."""
    wq, wk, v = params
    q = hidden[0] @ wq                                  # (B, H)   == W_q(hidden)[0]
    k = encoder_outputs @ wk                            # (B, T, H) == W_k(encoder_outputs)
    combined = jnp.tanh(q[:, None, :] + k)              # broadcast == repeat+transpose
    scores = jnp.einsum("bth,h->bt", combined, v[0])    # v(combined).squeeze(2)
    return jax.nn.softmax(scores, axis=1)


def make_params(key, hidden_dim):
    """Synthetic weights. Linear weights stored as (in, out) = PyTorch weight.T;
    v kept in its native (1, hidden_dim) PyTorch layout."""
    k0, k1, k2 = jax.random.split(key, 3)
    s = 0.1
    wq = s * jax.random.normal(k0, (hidden_dim, hidden_dim), jnp.float32)
    wk = s * jax.random.normal(k1, (hidden_dim, hidden_dim), jnp.float32)
    v = s * jax.random.normal(k2, (1, hidden_dim), jnp.float32)
    return (wq, wk, v)


if __name__ == "__main__":
    # Small shapes consistent with the module: batch=2, seq=8, hidden=32
    B, T, H = 2, 8, 32
    key = jax.random.PRNGKey(0)
    k_enc, k_hid, k_p = jax.random.split(key, 3)
    encoder_outputs = jax.random.normal(k_enc, (B, T, H), jnp.float32)
    hidden = jax.random.normal(k_hid, (1, B, H), jnp.float32)
    params = make_params(k_p, H)

    attn = additive_attention_pallas(encoder_outputs, hidden, params)
    jax.block_until_ready(attn)

    attn_ref = additive_attention_ref(encoder_outputs, hidden, params)
    assert attn.shape == (B, T)
    assert jnp.allclose(attn, attn_ref, atol=1e-5, rtol=1e-5)
    assert jnp.allclose(jnp.sum(attn, axis=1), jnp.ones((B,), jnp.float32), atol=1e-5)
    print("KERNEL_OK")
</pallas_src>

<mosaic_0001>
module attributes {stable_mosaic.version = 11 : i64} {
  func.func @_additive_attention_kernel(%arg0: memref<2x8x32xf32, #tpu.memory_space<vmem>>, %arg1: memref<1x2x32xf32, #tpu.memory_space<vmem>>, %arg2: memref<32x32xf32, #tpu.memory_space<vmem>>, %arg3: memref<32x32xf32, #tpu.memory_space<vmem>>, %arg4: memref<1x32xf32, #tpu.memory_space<vmem>>, %arg5: memref<2x8xf32, #tpu.memory_space<vmem>>) attributes {dimension_semantics = [], scalar_prefetch = 0 : i64, scratch_operands = 0 : i64, tpu.core_type = #tpu.core_type<tc>} {
    %c0 = arith.constant 0 : index
    %c0_0 = arith.constant 0 : index
    %c0_1 = arith.constant 0 : index
    %0 = vector.load %arg1[%c0, %c0_0, %c0_1] : memref<1x2x32xf32, #tpu.memory_space<vmem>>, vector<1x2x32xf32>
    %1 = vector.shape_cast %0 : vector<1x2x32xf32> to vector<2x32xf32>
    %c0_2 = arith.constant 0 : index
    %c0_3 = arith.constant 0 : index
    %2 = vector.load %arg2[%c0_2, %c0_3] : memref<32x32xf32, #tpu.memory_space<vmem>>, vector<32x32xf32>
    %cst = arith.constant dense<0.000000e+00> : vector<2x32xf32>
    %3 = tpu.matmul %1, %2, %cst {dimension_numbers = #tpu.dot_dimension_numbers<[1], [0], [0], [1], [0, 0, 1, 1], [], []>} : vector<2x32xf32>, vector<32x32xf32>, vector<2x32xf32> -> vector<2x32xf32>
    %c0_4 = arith.constant 0 : index
    %c0_5 = arith.constant 0 : index
    %c0_6 = arith.constant 0 : index
    %4 = vector.load %arg0[%c0_4, %c0_5, %c0_6] : memref<2x8x32xf32, #tpu.memory_space<vmem>>, vector<2x8x32xf32>
    %5 = vector.shape_cast %4 : vector<2x8x32xf32> to vector<16x32xf32>
    %c0_7 = arith.constant 0 : index
    %c0_8 = arith.constant 0 : index
    %6 = vector.load %arg3[%c0_7, %c0_8] : memref<32x32xf32, #tpu.memory_space<vmem>>, vector<32x32xf32>
    %cst_9 = arith.constant dense<0.000000e+00> : vector<16x32xf32>
    %7 = tpu.matmul %5, %6, %cst_9 {dimension_numbers = #tpu.dot_dimension_numbers<[1], [0], [0], [1], [0, 0, 1, 1], [], []>} : vector<16x32xf32>, vector<32x32xf32>, vector<16x32xf32> -> vector<16x32xf32>
    %8 = vector.shape_cast %7 : vector<16x32xf32> to vector<2x8x32xf32>
    %9 = vector.shape_cast %3 : vector<2x32xf32> to vector<2x1x32xf32>
    %10 = vector.broadcast %9 : vector<2x1x32xf32> to vector<2x8x32xf32>
    %11 = arith.addf %8, %10 : vector<2x8x32xf32>
    %12 = math.tanh %11 : vector<2x8x32xf32>
    %c0_10 = arith.constant 0 : index
    %c0_11 = arith.constant 0 : index
    %13 = vector.load %arg4[%c0_10, %c0_11] : memref<1x32xf32, #tpu.memory_space<vmem>>, vector<1x32xf32>
    %14 = vector.shape_cast %13 : vector<1x32xf32> to vector<1x1x32xf32>
    %15 = vector.broadcast %14 : vector<1x1x32xf32> to vector<2x8x32xf32>
    %16 = arith.mulf %12, %15 : vector<2x8x32xf32>
    %cst_12 = arith.constant dense<0.000000e+00> : vector<2x8xf32>
    %17 = vector.multi_reduction <add>, %16, %cst_12 [2] : vector<2x8x32xf32> to vector<2x8xf32>
    %cst_13 = arith.constant dense<0xFF800000> : vector<2xf32>
    %18 = vector.multi_reduction <maximumf>, %17, %cst_13 [1] : vector<2x8xf32> to vector<2xf32>
    %19 = vector.shape_cast %18 : vector<2xf32> to vector<2x1xf32>
    %20 = vector.broadcast %19 : vector<2x1xf32> to vector<2x8xf32>
    %21 = arith.subf %17, %20 : vector<2x8xf32>
    %22 = math.exp %21 : vector<2x8xf32>
    %cst_14 = arith.constant dense<0.000000e+00> : vector<2xf32>
    %23 = vector.multi_reduction <add>, %22, %cst_14 [1] : vector<2x8xf32> to vector<2xf32>
    %24 = vector.shape_cast %23 : vector<2xf32> to vector<2x1xf32>
    %25 = vector.broadcast %24 : vector<2x1xf32> to vector<2x8xf32>
    %26 = arith.divf %22, %25 : vector<2x8xf32>
    %c0_15 = arith.constant 0 : index
    %c0_16 = arith.constant 0 : index
    %27 = vector.load %arg5[%c0_15, %c0_16] : memref<2x8xf32, #tpu.memory_space<vmem>>, vector<2x8xf32>
    tpu.vector_store %arg5[%c0_15, %c0_16], %26 {strides = array<i32>} : memref<2x8xf32, #tpu.memory_space<vmem>>, vector<2x8xf32>,
    return
  }
}

</mosaic_0001>

<llo_original>
// kernel: tpu_custom_call.1
$region0: #{tpu_custom_call.1}
  #allocation0 [shape = 'u32[]', space=smem, size = 0x4, offset = 0x4, fixed_abs, tag = 'smem constant byte address 0x4 - core index']
  #allocation1 [shape = 'u32[72,128]{1,0:T(1,128)}', space=vmem, size = 0x9000, scoped, tag = 'internal scratch']
  %s0 = inlined_call_operand.hbm [shape: f32[2,8,32], index: 0, kind: input, shape index: {}]
  %s1 = inlined_call_operand.hbm [shape: f32[1,2,32], index: 1, kind: input, shape index: {}]
  %s2 = inlined_call_operand.hbm [shape: f32[32,32], index: 2, kind: input, shape index: {}]
  %s3 = inlined_call_operand.hbm [shape: f32[32,32], index: 3, kind: input, shape index: {}]
  %s4 = inlined_call_operand.vmem [shape: f32[1,32], index: 4, kind: input, shape index: {}]
  %s5 = inlined_call_operand.hbm [shape: f32[2,8], index: 5, kind: output, shape index: {}]
  %s6 = sld [smem:[#allocation0]]
  $region46: #{tpu_custom_call.1} parent=0
    _
  %s8 = ssub.s32 1, %s6
  %s9 = scalar_select 0, %s8, %s6
  $region1: #{tpu_custom_call.1} parent=0
    #allocation2 [shape = 'u8[8192]{0}', space=vmem, size = 0x2000, scoped, tag = 'input window, operand 0, single buffered']
    #allocation3 [shape = 's32[1]{0}', space=sflag, size = 0x4, scoped, tag = 'scoped memory for tpu_custom_call.1']
    #allocation4 [shape = 's32[1]{0}', space=sflag, size = 0x4, scoped, tag = 'scoped memory for tpu_custom_call.1']
    #allocation5 [shape = 'u8[1024]{0}', space=vmem, size = 0x400, scoped, tag = 'input window, operand 1, single buffered']
    #allocation6 [shape = 's32[1]{0}', space=sflag, size = 0x4, scoped, tag = 'scoped memory for tpu_custom_call.1']
    #allocation7 [shape = 'u8[16384]{0}', space=vmem, size = 0x4000, scoped, tag = 'input window, operand 2, single buffered']
    #allocation8 [shape = 'u8[16384]{0}', space=vmem, size = 0x4000, scoped, tag = 'input window, operand 3, single buffered']
    #allocation9 [shape = 's32[1]{0}', space=sflag, size = 0x4, scoped, tag = 'scoped memory for tpu_custom_call.1']
    #allocation10 [shape = 'u8[1024]{0}', space=vmem, size = 0x400, scoped, tag = 'output window, operand 0, single buffered']
    %10 = vsyncpa [#allocation3], 0
    %11 = vsyncpa [#allocation6], 0
    %12 = vsyncpa [#allocation9], 0
    %13 = vsyncpa [#allocation4], 0
    // Predicated region
    $region2: #{tpu_custom_call.1} parent=1 // pred_check
      _
    $region3: #{tpu_custom_call.1} parent=1 // pred_check_branch
      %15 = sbr.rel (0) target = $region5
    $region4: #{tpu_custom_call.1} parent=1 // pred_region
      %17 = vsyncadd [#allocation3], 0
      %s18 = sshll.u32 %s0, 4
      %s19 = int_to_ptr.hbm [resolvable:$true] %s18
      %s20 = sshll.u32 [#allocation2], 4
      %s21 = int_to_ptr.vmem [resolvable:$true] %s20
      %26 = dma.hbm_to_vmem [thread:$0]  %s19, 256, %s21, [#allocation3], 128, 128, 8
    $region5: #{tpu_custom_call.1} parent=1 // pred_fallthru
      _
    // Predicated region
    $region6: #{tpu_custom_call.1} parent=1 // pred_check
      _
    $region7: #{tpu_custom_call.1} parent=1 // pred_check_branch
      %28 = sbr.rel (0) target = $region9
    $region8: #{tpu_custom_call.1} parent=1 // pred_region
      %30 = vsyncadd [#allocation6], 0
      %s32 = sshll.u32 %s1, 4
      %s33 = int_to_ptr.hbm [resolvable:$true] %s32
      %s34 = sshll.u32 [#allocation5], 4
      %s35 = int_to_ptr.vmem [resolvable:$true] %s34
      %37 = dma.hbm_to_vmem [thread:$0]  %s33, 32, %s35, [#allocation6]
    $region9: #{tpu_custom_call.1} parent=1 // pred_fallthru
      _
    // Predicated region
    $region10: #{tpu_custom_call.1} parent=1 // pred_check
      _
    $region11: #{tpu_custom_call.1} parent=1 // pred_check_branch
      %39 = sbr.rel (0) target = $region13
    $region12: #{tpu_custom_call.1} parent=1 // pred_region
      %41 = vsyncadd [#allocation6], 0
      %s42 = sshll.u32 %s2, 4
      %s43 = int_to_ptr.hbm [resolvable:$true] %s42
      %s44 = sshll.u32 [#allocation7], 4
      %s45 = int_to_ptr.vmem [resolvable:$true] %s44
      %50 = dma.hbm_to_vmem [thread:$0]  %s43, 512, %s45, [#allocation6], 128, 128, 8
    $region13: #{tpu_custom_call.1} parent=1 // pred_fallthru
      _
    // Predicated region
    $region14: #{tpu_custom_call.1} parent=1 // pred_check
      _
    $region15: #{tpu_custom_call.1} parent=1 // pred_check_branch
      %52 = sbr.rel (0) target = $region17
    $region16: #{tpu_custom_call.1} parent=1 // pred_region
      %54 = vsyncadd [#allocation9], 0
      %s55 = sshll.u32 %s3, 4
      %s56 = int_to_ptr.hbm [resolvable:$true] %s55
      %s57 = sshll.u32 [#allocation8], 4
      %s58 = int_to_ptr.vmem [resolvable:$true] %s57
      %63 = dma.hbm_to_vmem [thread:$0]  %s56, 512, %s58, [#allocation9], 128, 128, 8
    $region17: #{tpu_custom_call.1} parent=1 // pred_fallthru
      _
    // Predicated region
    $region18: #{tpu_custom_call.1} parent=1 // pred_check
      _
    $region19: #{tpu_custom_call.1} parent=1 // pred_check_branch
      %65 = sbr.rel (0) target = $region21
    $region20: #{tpu_custom_call.1} parent=1 // pred_region
      _
    $region21: #{tpu_custom_call.1} parent=1 // pred_fallthru
      _
    // Predicated region
    $region22: #{tpu_custom_call.1} parent=1 // pred_check
      _
    $region23: #{tpu_custom_call.1} parent=1 // pred_check_branch
      %67 = sbr.rel (0) target = $region25
    $region24: #{tpu_custom_call.1} parent=1 // pred_region
      %69 = dma.done [#allocation3], 256
    $region25: #{tpu_custom_call.1} parent=1 // pred_fallthru
      _
    // Predicated region
    $region26: #{tpu_custom_call.1} parent=1 // pred_check
      _
    $region27: #{tpu_custom_call.1} parent=1 // pred_check_branch
      %71 = sbr.rel (0) target = $region29
    $region28: #{tpu_custom_call.1} parent=1 // pred_region
      %73 = dma.done [#allocation6], 32
    $region29: #{tpu_custom_call.1} parent=1 // pred_fallthru
      _
    // Predicated region
    $region30: #{tpu_custom_call.1} parent=1 // pred_check
      _
    $region31: #{tpu_custom_call.1} parent=1 // pred_check_branch
      %75 = sbr.rel (0) target = $region33
    $region32: #{tpu_custom_call.1} parent=1 // pred_region
      %77 = dma.done [#allocation6], 512
    $region33: #{tpu_custom_call.1} parent=1 // pred_fallthru
      _
    // Predicated region
    $region34: #{tpu_custom_call.1} parent=1 // pred_check
      _
    $region35: #{tpu_custom_call.1} parent=1 // pred_check_branch
      %79 = sbr.rel (0) target = $region37
    $region36: #{tpu_custom_call.1} parent=1 // pred_region
      %81 = dma.done [#allocation9], 512
    $region37: #{tpu_custom_call.1} parent=1 // pred_fallthru
      _
    %v82 = vld [vmem:[#allocation5] sm:$0x3]
    %v83 = vld [vmem:[#allocation7] sm:$0xff]
    %v84 = vld [vmem:[#allocation7 + $0x8] sm:$0xff]
    %v85 = vld [vmem:[#allocation7 + $0x10] sm:$0xff]
    %v86 = vld [vmem:[#allocation7 + $0x18] sm:$0xff]
    %vm87 = vcmask 261120
    %v89 = vsel %vm87, %v82, 0
    %91 = vmatpush.msra.mxu0 0.0
    %92 = vmatpush.msra.mxu0 0.0
    %93 = vmatpush.msra.mxu0 0.0
    %94 = vmatpush.msra.mxu0 0.0
    %95 = vmatpush.msra.mxu0 0.0
    %96 = vmatpush.msra.mxu0 0.0
    %97 = vmatpush.msra.mxu0 0.0
    %98 = vmatpush.msra.mxu0 0.0
    %99 = vmatpush.msra.mxu0 0.0
    %100 = vmatpush.msra.mxu0 0.0
    %101 = vmatpush.msra.mxu0 0.0
    %102 = vmatpush.msra.mxu0 0.0
    %103 = vmatpush.msra.mxu0 %v86
    %104 = vmatpush.msra.mxu0 %v85
    %105 = vmatpush.msra.mxu0 %v84
    %106 = vmatpush.msra.mxu0 %v83
    %107 = vmatmul.f32.gmra.mxu0 %v89
    %v108 = vpop.f32.mrf.mxu0
    %v109 = vadd.f32 0.0, %v108
    %110 = vdwg.mxu0
    %v111 = vld [vmem:[#allocation2] sm:$0xff]
    %v112 = vld [vmem:[#allocation2 + $0x8] sm:$0xff]
    %v113 = vld [vmem:[#allocation8] sm:$0xff]
    %v114 = vld [vmem:[#allocation8 + $0x8] sm:$0xff]
    %v115 = vld [vmem:[#allocation8 + $0x10] sm:$0xff]
    %v116 = vld [vmem:[#allocation8 + $0x18] sm:$0xff]
    %v118 = vsel %vm87, %v111, 0
    %v121 = vsel %vm87, %v112, 0
    %123 = vmatpush.msra.mxu0 0.0
    %124 = vmatpush.msra.mxu0 0.0
    %125 = vmatpush.msra.mxu0 0.0
    %126 = vmatpush.msra.mxu0 0.0
    %127 = vmatpush.msra.mxu0 0.0
    %128 = vmatpush.msra.mxu0 0.0
    %129 = vmatpush.msra.mxu0 0.0
    %130 = vmatpush.msra.mxu0 0.0
    %131 = vmatpush.msra.mxu0 0.0
    %132 = vmatpush.msra.mxu0 0.0
    %133 = vmatpush.msra.mxu0 0.0
    %134 = vmatpush.msra.mxu0 0.0
    %135 = vmatpush.msra.mxu0 %v116
    %136 = vmatpush.msra.mxu0 %v115
    %137 = vmatpush.msra.mxu0 %v114
    %138 = vmatpush.msra.mxu0 %v113
    %139 = vmatmul.f32.gmra.mxu0 %v118
    %v140 = vpop.f32.mrf.mxu0
    %v141 = vadd.f32 0.0, %v140
    %142 = vmatmul.f32.gmra.mxu0 %v121
    %v143 = vpop.f32.mrf.mxu0
    %v144 = vadd.f32 0.0, %v143
    %145 = vdwg.mxu0
    %v147 = vrot.slane %v109, 1
    %v148 = vperm.slane %v109, 0
    %v149 = vperm.slane %v147, 0
    %v152 = vadd.f32 %v141, %v148
    %v153 = vadd.f32 %v144, %v149
    %v154 = vtanh.pop %v152
    %v155 = vtanh.pop %v153
    %v156 = vld [vmem:[%s4] sm:$0x1]
    %v158 = vperm.slane %v156, 0
    %v160 = vmul.f32 %v154, %v158
    %v161 = vmul.f32 %v155, %v158
    %v162 = vsel %vm87, %v160, 0.0
    %163 = vadd.xlane.f32.xlu0 %v162
    %v164 = vpop.xlane.xlu0 %163
    %v165 = vsel %vm87, %v161, 0.0
    %166 = vadd.xlane.f32.xlu0 %v165
    %v167 = vpop.xlane.xlu0 %166
    %v170 = vlaneseq
    %v171 = vand.u32 %v170, 127
    %v172 = vperm.slane %v164, %v171
    %v173 = vperm.slane %v167, %v171
    %vm174 = vcmask 1041409
    %v175 = vsel %vm174, %v173, %v172
    %vm177 = vcmask 58368
    %v178 = vsel %vm177, %v175, -inf
    %179 = vmax.xlane.f32.xlu0 %v178
    %v180 = vpop.xlane.xlu0 %179
    %v182 = vperm.slane %v180, 0
    %v183 = vperm.slane %v180, 1
    %v186 = vsub.f32 %v164, %v182
    %v187 = vsub.f32 %v167, %v183
    %v188 = vmul.f32 %v186, 1.442695
    %v189 = vpow.pop %v188
    %v190 = vmul.f32 %v187, 1.442695
    %v191 = vpow.pop %v190
    %194 = vset.pattern.permute.xlu0 0
    %195 = vperm.xlu0 %194, %v189
    %v196 = vpop.permute.xlu0 %195
    %197 = vset.pattern.permute.xlu0 0
    %198 = vperm.xlu0 %197, %v191
    %v199 = vpop.permute.xlu0 %198
    %v200 = vperm.slane %v196, %v171
    %v201 = vperm.slane %v199, %v171
    %v202 = vsel %vm174, %v201, %v200
    %v204 = vsel %vm177, %v202, 0.0
    %205 = vadd.xlane.f32.xlu0 %v204
    %v206 = vpop.xlane.xlu0 %205
    %v208 = vperm.slane %v206, 0
    %v209 = vperm.slane %v206, 1
    %v212 = vrcp.pop %v208
    %v213 = vmul.f32 %v208, %v212
    %v214 = vsub.f32 1.0, %v213
    %v215 = vmul.f32 %v212, %v214
    %v216 = vadd.f32 %v212, %v215
    %vm217 = vweird.f32 %v208
    %vm218 = vweird.f32 %v212
    %vm219 = vmor %vm217, %vm218
    %v220 = vsel %vm219, %v212, %v216
    %v221 = vand.u32 2147483647, %v208
    %vm222 = vcmp.eq.f32.partialorder %v221, 8.507059e+37
    %v223 = vand.u32 %v208, 2147483648
    %v224 = vor.u32 1.1754944e-38, %v223
    %v225 = vsel %vm222, %v224, %v220
    %v226 = vmul.f32 %v189, %v225
    %v227 = vrcp.pop %v209
    %v228 = vmul.f32 %v209, %v227
    %v229 = vsub.f32 1.0, %v228
    %v230 = vmul.f32 %v227, %v229
    %v231 = vadd.f32 %v227, %v230
    %vm232 = vweird.f32 %v209
    %vm233 = vweird.f32 %v227
    %vm234 = vmor %vm232, %vm233
    %v235 = vsel %vm234, %v227, %v231
    %v236 = vand.u32 2147483647, %v209
    %vm237 = vcmp.eq.f32.partialorder %v236, 8.507059e+37
    %v238 = vand.u32 %v209, 2147483648
    %v239 = vor.u32 1.1754944e-38, %v238
    %v240 = vsel %vm237, %v239, %v235
    %v241 = vmul.f32 %v191, %v240
    %244 = vset.pattern.permute.xlu0 0
    %245 = vperm.xlu0 %244, %v226
    %v246 = vpop.permute.xlu0 %245
    %247 = vset.pattern.permute.xlu0 0
    %248 = vperm.xlu0 %247, %v241
    %v249 = vpop.permute.xlu0 %248
    %v250 = vperm.slane %v246, %v171
    %v251 = vperm.slane %v249, %v171
    %v252 = vsel %vm174, %v251, %v250
    %254 = vst.msk [vmem:[#allocation10] sm:$0x3] %vm177, %v252
    // Predicated region
    $region38: #{tpu_custom_call.1} parent=1 // pred_check
      _
    $region39: #{tpu_custom_call.1} parent=1 // pred_check_branch
      %256 = sbr.rel (0) target = $region41
    $region40: #{tpu_custom_call.1} parent=1 // pred_region
      %258 = vsyncadd [#allocation4], 0
      %s260 = sshll.u32 [#allocation10], 4
      %s261 = int_to_ptr.vmem [resolvable:$true] %s260
      %s262 = sshll.u32 %s5, 4
      %s263 = int_to_ptr.hbm [resolvable:$true] %s262
      %265 = dma.vmem_to_hbm [thread:$0]  %s261, 32, %s263, [#allocation4]
    $region41: #{tpu_custom_call.1} parent=1 // pred_fallthru
      _
    // Predicated region
    $region42: #{tpu_custom_call.1} parent=1 // pred_check
      _
    $region43: #{tpu_custom_call.1} parent=1 // pred_check_branch
      %267 = sbr.rel (0) target = $region45
    $region44: #{tpu_custom_call.1} parent=1 // pred_region
      %269 = dma.done [#allocation4], 32
    $region45: #{tpu_custom_call.1} parent=1 // pred_fallthru
      _
    %270 = vsyncpa [#allocation3], 1
    %271 = vsyncpa [#allocation6], 1
    %272 = vsyncpa [#allocation9], 1
    %273 = vsyncpa [#allocation4], 1

</llo_original>
